<compile_context>
chip_gen: v5e
topology: v5e:2x2
jax: 0.10.0
libtpu: 0.0.40
codegen_flags: <defaults>
</compile_context>

<pallas_src>
import functools

import jax
import jax.numpy as jnp
from jax.experimental import pallas as pl
from jax.experimental.pallas import tpu as pltpu


def _round_up(x: int, m: int) -> int:
    return (x + m - 1) // m * m


def _vmem_capacity_bytes() -> int:
    """Physical VMEM per TensorCore; conservative v7x default if query fails."""
    try:
        return int(pltpu.get_tpu_info().vmem_capacity_bytes)
    except Exception:
        return 64 * 1024 * 1024


def _pick_tile(dim: int, grain: int, cap: int) -> int:
    """Largest grain-multiple tile <= cap that keeps padding overshoot small."""
    if dim <= cap:
        return _round_up(dim, grain)
    best_t = cap
    best_pad = _round_up(dim, cap) - dim
    t = cap
    while t >= grain:
        pad = _round_up(dim, t) - dim
        if pad * 16 <= dim:          # <= ~6% wasted MACs: take the biggest such tile
            return t
        if pad < best_pad:
            best_t, best_pad = t, pad
        t -= grain
    return best_t


def dense_sigmoid_kernel(x_ref, w_ref, b_ref, o_ref):
    """One (tm, tn) output tile; K is the innermost ('arbitrary') grid axis.

    The f32 output block is the accumulator (resident across K); bias add and
    sigmoid are fused into the last K step.
    """
    k = pl.program_id(2)

    @pl.when(k == 0)
    def _():
        o_ref[...] = jnp.zeros_like(o_ref)

    # bf16 operands -> MXU-native; f32 accumulation into the resident block.
    o_ref[...] += jnp.dot(x_ref[...], w_ref[...],
                          preferred_element_type=jnp.float32)

    @pl.when(k == pl.num_programs(2) - 1)
    def _():
        z = o_ref[...] + b_ref[...]                       # bias kept in f32
        # sigmoid(z) = 1 / (1 + exp(-z)); exp + reciprocal both on the EUP slot.
        o_ref[...] = pl.reciprocal(1.0 + jnp.exp(-z), approx=True).astype(o_ref.dtype)


@jax.jit
def our_dense_layer(x, W, b):
    """Pallas equivalent of OurDenseLayer.forward: sigmoid(x @ W + b)."""
    M, K = x.shape
    Kw, N = W.shape
    assert K == Kw, "x / W inner dims must match"
    b = jnp.reshape(b, (1, N)).astype(jnp.float32)        # accept (N,) or (1, N)

    # --- generation-dependent budgets ------------------------------------
    vmem_cap = _vmem_capacity_bytes()
    big_vmem = vmem_cap >= 96 * 1024 * 1024               # v5e/v6e (128 MiB) vs v7x (64 MiB)
    tm_cap, tn_cap = 512, 512
    tk_cap = 2048 if big_vmem else 1024
    vmem_limit = min(100 * 1024 * 1024, int(0.75 * vmem_cap))

    # --- tile selection (bf16 sublane grain = 16, lane grain = 128) -------
    tm = _pick_tile(M, 16, tm_cap)
    tn = _pick_tile(N, 128, tn_cap)
    tk = _pick_tile(K, 128, tk_cap)

    Mp = _round_up(M, tm)
    Np = _round_up(N, tn)
    Kp = _round_up(K, tk)

    # --- bf16 MXU feed; pad only when required ----------------------------
    # (K zero-padding is required for correctness; zeros add nothing to the dot.)
    xb = x.astype(jnp.bfloat16)
    Wb = W.astype(jnp.bfloat16)
    if (Mp, Kp) != (M, K):
        xb = jnp.pad(xb, ((0, Mp - M), (0, Kp - K)))
    if (Kp, Np) != (K, N):
        Wb = jnp.pad(Wb, ((0, Kp - K), (0, Np - N)))
    if Np != N:
        b = jnp.pad(b, ((0, 0), (0, Np - N)))

    grid = (Mp // tm, Np // tn, Kp // tk)

    out_padded = pl.pallas_call(
        dense_sigmoid_kernel,
        out_shape=jax.ShapeDtypeStruct((Mp, Np), jnp.float32),
        grid_spec=pltpu.PrefetchScalarGridSpec(
            num_scalar_prefetch=0,
            grid=grid,
            in_specs=[
                pl.BlockSpec((tm, tk), lambda i, j, k: (i, k)),   # x tile (bf16)
                pl.BlockSpec((tk, tn), lambda i, j, k: (k, j)),   # W tile (bf16)
                pl.BlockSpec((1, tn), lambda i, j, k: (0, j)),    # bias row (f32, lane-dense)
            ],
            out_specs=pl.BlockSpec((tm, tn), lambda i, j, k: (i, j)),
        ),
        compiler_params=pltpu.CompilerParams(
            # M/N parallel (megacore shard on v7x when >= 2 tiles), K arbitrary
            # (accumulation axis, innermost).
            dimension_semantics=("parallel", "parallel", "arbitrary"),
            vmem_limit_bytes=vmem_limit,
        ),
    )(xb, Wb, b)

    # Strip alignment padding (padded rows/cols hold sigmoid(0) = 0.5).
    return out_padded[:M, :N]


if __name__ == "__main__":
    n_output_nodes = 3
    batch, d = 2, 4

    key = jax.random.PRNGKey(0)
    kx, kw, kb = jax.random.split(key, 3)

    # Deterministic "torch.rand"-style init (uniform [0, 1)).
    x = jax.random.uniform(kx, (batch, d), dtype=jnp.float32)
    W = jax.random.uniform(kw, (d, n_output_nodes), dtype=jnp.float32)
    b = jax.random.uniform(kb, (1, n_output_nodes), dtype=jnp.float32)

    out = our_dense_layer(x, W, b)
    out = jax.block_until_ready(out)

    # Reference check (plain f32 JAX).  Tolerance loosened because the kernel
    # feeds the MXU bf16 operands and uses the approx EUP reciprocal.
    ref = jax.nn.sigmoid(jnp.matmul(x, W) + b)
    assert out.shape == (batch, n_output_nodes)
    assert jnp.allclose(out, ref, atol=2e-2, rtol=2e-2), (out, ref)

    print("KERNEL_OK")
</pallas_src>

<mosaic_0001>
module attributes {stable_mosaic.version = 11 : i64} {
  func.func @dense_sigmoid_kernel(%arg0: i32, %arg1: i32, %arg2: i32, %arg3: memref<16x128xbf16, #tpu.memory_space<vmem>>, %arg4: memref<128x128xbf16, #tpu.memory_space<vmem>>, %arg5: memref<1x128xf32, #tpu.memory_space<vmem>>, %arg6: memref<16x128xf32, #tpu.memory_space<vmem>>) attributes {dimension_semantics = [#tpu.dimension_semantics<parallel>, #tpu.dimension_semantics<parallel>, #tpu.dimension_semantics<arbitrary>], iteration_bounds = array<i64: 1, 1, 1>, scalar_prefetch = 0 : i64, scratch_operands = 0 : i64, tpu.core_type = #tpu.core_type<tc>, window_params = [{transform_indices = @transform_0, window_bounds = array<i64: 16, 128>}, {transform_indices = @transform_1, window_bounds = array<i64: 128, 128>}, {transform_indices = @transform_2, window_bounds = array<i64: 1, 128>}, {transform_indices = @transform_3, window_bounds = array<i64: 16, 128>}]} {
    %c0_i32 = arith.constant 0 : i32
    %0 = arith.cmpi eq, %arg2, %c0_i32 : i32
    %1 = arith.extui %0 : i1 to i32
    %c0_i32_0 = arith.constant 0 : i32
    %2 = arith.cmpi ne, %1, %c0_i32_0 : i32
    scf.if %2 {
      %cst_10 = arith.constant 0.000000e+00 : f32
      %12 = vector.broadcast %cst_10 : f32 to vector<16x128xf32>
      %c0_11 = arith.constant 0 : index
      %c0_12 = arith.constant 0 : index
      %13 = vector.load %arg6[%c0_11, %c0_12] : memref<16x128xf32, #tpu.memory_space<vmem>>, vector<16x128xf32>
      tpu.vector_store %arg6[%c0_11, %c0_12], %12 {strides = array<i32>} : memref<16x128xf32, #tpu.memory_space<vmem>>, vector<16x128xf32>,
    } else {
    }
    %c0 = arith.constant 0 : index
    %c0_1 = arith.constant 0 : index
    %3 = vector.load %arg6[%c0, %c0_1] : memref<16x128xf32, #tpu.memory_space<vmem>>, vector<16x128xf32>
    %c0_2 = arith.constant 0 : index
    %c0_3 = arith.constant 0 : index
    %4 = vector.load %arg3[%c0_2, %c0_3] : memref<16x128xbf16, #tpu.memory_space<vmem>>, vector<16x128xbf16>
    %c0_4 = arith.constant 0 : index
    %c0_5 = arith.constant 0 : index
    %5 = vector.load %arg4[%c0_4, %c0_5] : memref<128x128xbf16, #tpu.memory_space<vmem>>, vector<128x128xbf16>
    %cst = arith.constant dense<0.000000e+00> : vector<16x128xf32>
    %6 = tpu.matmul %4, %5, %cst {dimension_numbers = #tpu.dot_dimension_numbers<[1], [0], [0], [1], [0, 0, 1, 1], [], []>} : vector<16x128xbf16>, vector<128x128xbf16>, vector<16x128xf32> -> vector<16x128xf32>
    %7 = arith.addf %3, %6 : vector<16x128xf32>
    %c0_6 = arith.constant 0 : index
    %c0_7 = arith.constant 0 : index
    %8 = vector.load %arg6[%c0_6, %c0_7] : memref<16x128xf32, #tpu.memory_space<vmem>>, vector<16x128xf32>
    tpu.vector_store %arg6[%c0_6, %c0_7], %7 {strides = array<i32>} : memref<16x128xf32, #tpu.memory_space<vmem>>, vector<16x128xf32>,
    %c0_i32_8 = arith.constant 0 : i32
    %9 = arith.cmpi eq, %arg2, %c0_i32_8 : i32
    %10 = arith.extui %9 : i1 to i32
    %c0_i32_9 = arith.constant 0 : i32
    %11 = arith.cmpi ne, %10, %c0_i32_9 : i32
    scf.if %11 {
      %c0_10 = arith.constant 0 : index
      %c0_11 = arith.constant 0 : index
      %12 = vector.load %arg6[%c0_10, %c0_11] : memref<16x128xf32, #tpu.memory_space<vmem>>, vector<16x128xf32>
      %c0_12 = arith.constant 0 : index
      %c0_13 = arith.constant 0 : index
      %13 = vector.load %arg5[%c0_12, %c0_13] : memref<1x128xf32, #tpu.memory_space<vmem>>, vector<1x128xf32>
      %14 = vector.broadcast %13 : vector<1x128xf32> to vector<16x128xf32>
      %15 = arith.addf %12, %14 : vector<16x128xf32>
      %cst_14 = arith.constant 0.000000e+00 : f32
      %16 = vector.broadcast %cst_14 : f32 to vector<16x128xf32>
      %17 = arith.subf %16, %15 : vector<16x128xf32>
      %18 = math.exp %17 : vector<16x128xf32>
      %cst_15 = arith.constant 1.000000e+00 : f32
      %19 = vector.broadcast %cst_15 : f32 to vector<16x128xf32>
      %20 = arith.addf %19, %18 : vector<16x128xf32>
      %21 = tpu.reciprocal %20 {approx = true} : vector<16x128xf32> -> vector<16x128xf32>
      %c0_16 = arith.constant 0 : index
      %c0_17 = arith.constant 0 : index
      %22 = vector.load %arg6[%c0_16, %c0_17] : memref<16x128xf32, #tpu.memory_space<vmem>>, vector<16x128xf32>
      tpu.vector_store %arg6[%c0_16, %c0_17], %21 {strides = array<i32>} : memref<16x128xf32, #tpu.memory_space<vmem>>, vector<16x128xf32>,
    } else {
    }
    return
  }
  func.func @transform_0(%arg0: i32, %arg1: i32, %arg2: i32) -> (i32, i32) {
    %c0_i32 = arith.constant 0 : i32
    return %arg0, %arg2 : i32, i32
  }
  func.func @transform_1(%arg0: i32, %arg1: i32, %arg2: i32) -> (i32, i32) {
    %c0_i32 = arith.constant 0 : i32
    return %arg2, %arg1 : i32, i32
  }
  func.func @transform_2(%arg0: i32, %arg1: i32, %arg2: i32) -> (i32, i32) {
    %c0_i32 = arith.constant 0 : i32
    %c0_i32_0 = arith.constant 0 : i32
    return %c0_i32, %arg1 : i32, i32
  }
  func.func @transform_3(%arg0: i32, %arg1: i32, %arg2: i32) -> (i32, i32) {
    %c0_i32 = arith.constant 0 : i32
    return %arg0, %arg1 : i32, i32
  }
}

</mosaic_0001>

<llo_original>
// kernel: our_dense_layer.1
$region0: #{our_dense_layer.1}
  #allocation0 [shape = 'u32[]', space=smem, size = 0x4, offset = 0x4, fixed_abs, tag = 'smem constant byte address 0x4 - core index']
  #allocation1 [shape = 'u32[72,128]{1,0:T(1,128)}', space=vmem, size = 0x9000, scoped, tag = 'internal scratch']
  %s0 = inlined_call_operand.vmem [shape: bf16[16,128], index: 0, kind: input, shape index: {}]
  %s1 = inlined_call_operand.vmem [shape: bf16[128,128], index: 1, kind: input, shape index: {}]
  %s2 = inlined_call_operand.vmem [shape: f32[1,128], index: 2, kind: input, shape index: {}]
  %s3 = inlined_call_operand.vmem [shape: f32[16,128], index: 3, kind: output, shape index: {}]
  %s4 = sld [smem:[#allocation0]]
  $region30: #{our_dense_layer.1} parent=0
    _
  %s6 = ssub.s32 1, %s4
  %s7 = scalar_select 0, %s6, %s4
  // Predicated region
  $region2: #{our_dense_layer.1} parent=0 // pred_check
    _
  $region3: #{our_dense_layer.1} parent=0 // pred_check_branch
    %9 = sbr.rel (0) target = $region5
  $region4: #{our_dense_layer.1} parent=0 // pred_region
    _
  $region5: #{our_dense_layer.1} parent=0 // pred_fallthru
    _
  // Predicated region
  $region6: #{our_dense_layer.1} parent=0 // pred_check
    _
  $region7: #{our_dense_layer.1} parent=0 // pred_check_branch
    %11 = sbr.rel (0) target = $region9
  $region8: #{our_dense_layer.1} parent=0 // pred_region
    _
  $region9: #{our_dense_layer.1} parent=0 // pred_fallthru
    _
  // Predicated region
  $region10: #{our_dense_layer.1} parent=0 // pred_check
    _
  $region11: #{our_dense_layer.1} parent=0 // pred_check_branch
    %13 = sbr.rel (0) target = $region13
  $region12: #{our_dense_layer.1} parent=0 // pred_region
    _
  $region13: #{our_dense_layer.1} parent=0 // pred_fallthru
    _
  %p14 = scmp.eq.s32.totalorder 0, 0
  // Predicated region
  $region14: #{our_dense_layer.1} parent=0 // pred_check
    %p15 = pneg %p14
  $region15: #{our_dense_layer.1} parent=0 // pred_check_branch
    %17 = sbr.rel (%p15) target = $region17
  $region16: #{our_dense_layer.1} parent=0 // pred_region
    %18 = vst [vmem:[%s3] sm:$0xff] 0.0
    %19 = vst [vmem:[%s3 + $0x8] sm:$0xff] 0.0
  $region17: #{our_dense_layer.1} parent=0 // pred_fallthru
    _
  %v20 = vld [vmem:[%s3] sm:$0xff]
  %v21 = vld [vmem:[%s3 + $0x8] sm:$0xff]
  %v22 = vld [vmem:[%s0] sm:$0xf]
  %v23 = vld [vmem:[%s0 + $0x4] sm:$0xf]
  %v24 = vld [vmem:[%s1] sm:$0xf]
  %v25 = vld [vmem:[%s1 + $0x4] sm:$0xf]
  %v26 = vld [vmem:[%s1 + $0x8] sm:$0xf]
  %v27 = vld [vmem:[%s1 + $0xc] sm:$0xf]
  %v28 = vld [vmem:[%s1 + $0x10] sm:$0xf]
  %v29 = vld [vmem:[%s1 + $0x14] sm:$0xf]
  %v30 = vld [vmem:[%s1 + $0x18] sm:$0xf]
  %v31 = vld [vmem:[%s1 + $0x1c] sm:$0xf]
  %v32 = vld [vmem:[%s1 + $0x20] sm:$0xf]
  %v33 = vld [vmem:[%s1 + $0x24] sm:$0xf]
  %v34 = vld [vmem:[%s1 + $0x28] sm:$0xf]
  %v35 = vld [vmem:[%s1 + $0x2c] sm:$0xf]
  %v36 = vld [vmem:[%s1 + $0x30] sm:$0xf]
  %v37 = vld [vmem:[%s1 + $0x34] sm:$0xf]
  %v38 = vld [vmem:[%s1 + $0x38] sm:$0xf]
  %v39 = vld [vmem:[%s1 + $0x3c] sm:$0xf]
  %v42 = vunpack.c.l.b16 %v22
  %v43 = vunpack.c.l.b16 %v23
  %v44 = vpack.c.b16 %v43, %v42
  %v62 = vunpack.c.l.b16 %v24
  %v63 = vunpack.c.l.b16 %v25
  %v64 = vunpack.c.l.b16 %v26
  %v65 = vunpack.c.l.b16 %v27
  %v66 = vunpack.c.l.b16 %v28
  %v67 = vunpack.c.l.b16 %v29
  %v68 = vunpack.c.l.b16 %v30
  %v69 = vunpack.c.l.b16 %v31
  %v70 = vunpack.c.l.b16 %v32
  %v71 = vunpack.c.l.b16 %v33
  %v72 = vunpack.c.l.b16 %v34
  %v73 = vunpack.c.l.b16 %v35
  %v74 = vunpack.c.l.b16 %v36
  %v75 = vunpack.c.l.b16 %v37
  %v76 = vunpack.c.l.b16 %v38
  %v77 = vunpack.c.l.b16 %v39
  %v78 = vpack.c.b16 %v63, %v62
  %v79 = vpack.c.b16 %v65, %v64
  %v80 = vpack.c.b16 %v67, %v66
  %v81 = vpack.c.b16 %v69, %v68
  %v82 = vpack.c.b16 %v71, %v70
  %v83 = vpack.c.b16 %v73, %v72
  %v84 = vpack.c.b16 %v75, %v74
  %v85 = vpack.c.b16 %v77, %v76
  %94 = vmatpush.bf16.msra.mxu0 %v85
  %95 = vmatpush.bf16.msra.mxu0 %v84
  %96 = vmatpush.bf16.msra.mxu0 %v83
  %97 = vmatpush.bf16.msra.mxu0 %v82
  %98 = vmatpush.bf16.msra.mxu0 %v81
  %99 = vmatpush.bf16.msra.mxu0 %v80
  %100 = vmatpush.bf16.msra.mxu0 %v79
  %101 = vmatpush.bf16.msra.mxu0 %v78
  %102 = vmatmul.bf16.gmra.mxu0 %v44
  %v103 = vpop.f32.mrf.mxu0
  %v104 = vadd.f32 0.0, %v103
  %v105 = vpop.f32.mrf.mxu0
  %v106 = vadd.f32 0.0, %v105
  %107 = vdwg.mxu0
  %v108 = vadd.f32 %v20, %v104
  %v109 = vadd.f32 %v21, %v106
  %110 = vst [vmem:[%s3] sm:$0xff] %v108
  %111 = vst [vmem:[%s3 + $0x8] sm:$0xff] %v109
  // Predicated region
  $region18: #{our_dense_layer.1} parent=0 // pred_check
    %p112 = pneg %p14
  $region19: #{our_dense_layer.1} parent=0 // pred_check_branch
    %114 = sbr.rel (%p112) target = $region21
  $region20: #{our_dense_layer.1} parent=0 // pred_region
    %v115 = vld [vmem:[%s3] sm:$0xff]
    %v116 = vld [vmem:[%s3 + $0x8] sm:$0xff]
    %v117 = vld [vmem:[%s2] sm:$0x1]
    %v119 = vperm.slane %v117, 0
    %v121 = vadd.f32 %v115, %v119
    %v122 = vadd.f32 %v116, %v119
    %v123 = vsub.f32 0.0, %v121
    %v124 = vsub.f32 0.0, %v122
    %v125 = vmul.f32 %v123, 1.442695
    %v126 = vpow.pop %v125
    %v127 = vmul.f32 %v124, 1.442695
    %v128 = vpow.pop %v127
    %v129 = vadd.f32 %v126, 1.0
    %v130 = vadd.f32 %v128, 1.0
    %v131 = vrcp.pop %v129
    %v132 = vrcp.pop %v130
    %133 = vst [vmem:[%s3] sm:$0xff] %v131
    %134 = vst [vmem:[%s3 + $0x8] sm:$0xff] %v132
  $region21: #{our_dense_layer.1} parent=0 // pred_fallthru
    _
  // Predicated region
  $region22: #{our_dense_layer.1} parent=0 // pred_check
    _
  $region23: #{our_dense_layer.1} parent=0 // pred_check_branch
    %136 = sbr.rel (0) target = $region25
  $region24: #{our_dense_layer.1} parent=0 // pred_region
    _
  $region25: #{our_dense_layer.1} parent=0 // pred_fallthru
    _
  // Predicated region
  $region26: #{our_dense_layer.1} parent=0 // pred_check
    _
  $region27: #{our_dense_layer.1} parent=0 // pred_check_branch
    %138 = sbr.rel (0) target = $region29
  $region28: #{our_dense_layer.1} parent=0 // pred_region
    _
  $region29: #{our_dense_layer.1} parent=0 // pred_fallthru
    _

</llo_original>
